<compile_context>
chip_gen: v5e
topology: v5e:2x2
jax: 0.10.0
libtpu: 0.0.40
codegen_flags: <defaults>
</compile_context>

<pallas_src>
import functools

import jax
import jax.numpy as jnp
from jax import lax
from jax.experimental import pallas as pl
from jax.experimental.pallas import tpu as pltpu

LANE = 128


def _round_up(x, m):
    return (x + m - 1) // m * m


# ---------------------------------------------------------------------------
# Pallas kernel: one batch tile (TB rows, TB % 128 == 0), all layers resident.
# ---------------------------------------------------------------------------
def _local_net_v_kernel(state_ref, w_in_ref, b_in_ref, w_h_ref, b_h_ref,
                        w_out_ref, b_out_ref, out_ref, *, num_layers, s_dim):
    x = state_ref[...].astype(jnp.float32)                  # (TB, s_dim)
    tb = x.shape[0]
    h_pad = b_in_ref.shape[1]
    mm_dtype = w_h_ref.dtype                                # bf16 matmul operands

    # fc_in: K == s_dim (tiny) -> keep it off the MXU; s_dim rank-1
    # broadcast multiply-adds on the VPU.
    h = jnp.broadcast_to(b_in_ref[...], (tb, h_pad))        # (TB, H_pad)
    for k in range(s_dim):
        h = h + x[:, k:k + 1] * w_in_ref[k:k + 1, :]
    h = jnp.maximum(h, 0.0)

    # Hidden layers: dense lane-aligned (H_pad x H_pad) MXU matmuls, bf16
    # operands with f32 accumulation; bias-add / ReLU stay f32 on the VPU.
    for i in range(num_layers):
        h = jnp.dot(h.astype(mm_dtype), w_h_ref[i],
                    preferred_element_type=jnp.float32)
        h = jnp.maximum(h + b_h_ref[i], 0.0)

    # fc_out (N == 1): per-128-row chunk compute value_row = w_out @ h_chunk^T,
    # so the TB values land lane-dense in a (TB/128, 128) output block
    # (4 B/row of HBM writeback instead of the old broadcast 512 B/row slab).
    w_out_row = w_out_ref[...].astype(mm_dtype)             # (1, H_pad)
    b_out = b_out_ref[0]                                    # SMEM scalar
    rows = []
    for s in range(out_ref.shape[0]):
        h_chunk = h[s * LANE:(s + 1) * LANE, :].astype(mm_dtype)   # (128, H_pad)
        rows.append(
            lax.dot_general(w_out_row, h_chunk,
                            (((1,), (1,)), ((), ())),              # w @ h_chunk^T
                            preferred_element_type=jnp.float32))   # (1, 128)
    out_ref[...] = (jnp.concatenate(rows, axis=0) + b_out).astype(out_ref.dtype)


# ---------------------------------------------------------------------------
# Wrapper: batch-tiled parallel grid, lane-dense (b_pad/128, 128) output.
# ---------------------------------------------------------------------------
def local_net_v_forward(state, padded_params, *, num_layers, block_b=512):
    w_in, b_in, w_h, b_h, w_out, b_out = padded_params
    B, s_dim = state.shape

    # Batch tile: multiple of 128 rows (lane-dense value output); default 512
    # rows so the kernel is not bound by per-grid-step overhead.
    tb = _round_up(min(block_b, B), LANE)
    # v7x megacore: prefer >=2 grid steps whenever the batch spans >=2 tiles.
    if B > LANE:
        tb = min(tb, _round_up((B + 1) // 2, LANE))
    b_pad = _round_up(B, tb)
    if b_pad != B:
        state = jnp.pad(state, ((0, b_pad - B), (0, 0)))
    grid = (b_pad // tb,)

    kernel = functools.partial(_local_net_v_kernel,
                               num_layers=num_layers, s_dim=s_dim)

    out = pl.pallas_call(
        kernel,
        out_shape=jax.ShapeDtypeStruct((b_pad // LANE, LANE), jnp.float32),
        grid=grid,
        in_specs=[
            pl.BlockSpec((tb, s_dim), lambda i: (i, 0)),      # state tile
            pl.BlockSpec(w_in.shape, lambda i: (0, 0)),       # (s_dim, H_pad) f32
            pl.BlockSpec(b_in.shape, lambda i: (0, 0)),       # (1, H_pad)     f32
            pl.BlockSpec(w_h.shape, lambda i: (0, 0, 0)),     # (L, H_pad, H_pad) bf16
            pl.BlockSpec(b_h.shape, lambda i: (0, 0, 0)),     # (L, 1, H_pad)  f32
            pl.BlockSpec(w_out.shape, lambda i: (0, 0)),      # (1, H_pad)     bf16
            pl.BlockSpec(memory_space=pltpu.MemorySpace.SMEM),  # b_out scalar
        ],
        out_specs=pl.BlockSpec((tb // LANE, LANE), lambda i: (i, 0)),
        compiler_params=pltpu.CompilerParams(
            # batch tiles are independent -> megacore sharding on v7x
            dimension_semantics=("parallel",),
        ),
    )(state, w_in, b_in, w_h, b_h, w_out, b_out)

    # (b_pad/128, 128) row-major == batch order -> (B, 1) column.
    return out.reshape(b_pad, 1)[:B]


# ---------------------------------------------------------------------------
# Deterministic init (PyTorch-Linear-style uniform(-1/sqrt(fan_in), ...)).
# Returns (padded params for the kernel, raw f32 params for the reference).
# Weights are stored pre-transposed so the kernel computes x @ W + b.
# ---------------------------------------------------------------------------
def init_params(key, s_dim, h_dim, num_layers, h_pad=None,
                matmul_dtype=jnp.bfloat16):
    if h_pad is None:
        h_pad = _round_up(h_dim, LANE)
    ks = jax.random.split(key, 6)

    def uinit(k, shape, fan_in):
        bound = 1.0 / jnp.sqrt(jnp.float32(fan_in))
        return jax.random.uniform(k, shape, jnp.float32, -bound, bound)

    w_in = uinit(ks[0], (s_dim, h_dim), s_dim)                 # fc_in.weight.T
    b_in = uinit(ks[1], (1, h_dim), s_dim)                     # fc_in.bias
    w_h = uinit(ks[2], (num_layers, h_dim, h_dim), h_dim)      # fc_n[i].weight.T
    b_h = uinit(ks[3], (num_layers, 1, h_dim), h_dim)          # fc_n[i].bias
    w_out = uinit(ks[4], (1, h_dim), h_dim)                    # fc_out.weight (row)
    b_out = uinit(ks[5], (1, 1), h_dim)                        # fc_out.bias
    raw = (w_in, b_in, w_h, b_h, w_out, b_out)

    # Zero-pad hidden dim to lane width (exact: ReLU(0)=0, zero cols/rows inert).
    # MXU operands (hidden weights, fc_out row) stored in bf16.
    w_in_p = jnp.zeros((s_dim, h_pad), jnp.float32).at[:, :h_dim].set(w_in)
    b_in_p = jnp.zeros((1, h_pad), jnp.float32).at[:, :h_dim].set(b_in)
    w_h_p = (jnp.zeros((num_layers, h_pad, h_pad), jnp.float32)
             .at[:, :h_dim, :h_dim].set(w_h)).astype(matmul_dtype)
    b_h_p = (jnp.zeros((num_layers, 1, h_pad), jnp.float32)
             .at[:, :, :h_dim].set(b_h))
    w_out_p = (jnp.zeros((1, h_pad), jnp.float32)
               .at[:, :h_dim].set(w_out)).astype(matmul_dtype)
    b_out_p = b_out.reshape(1).astype(jnp.float32)             # SMEM scalar
    padded = (w_in_p, b_in_p, w_h_p, b_h_p, w_out_p, b_out_p)
    return padded, raw


# Pure-JAX f32 reference on the unpadded parameters.
def reference_forward(state, raw_params, *, num_layers):
    w_in, b_in, w_h, b_h, w_out, b_out = raw_params
    h = jnp.maximum(state @ w_in + b_in, 0.0)
    for i in range(num_layers):
        h = jnp.maximum(h @ w_h[i] + b_h[i], 0.0)
    return h @ w_out.T + b_out


if __name__ == "__main__":
    # MountainCar-like value head: state dim = 2, hidden = 32, 2 hidden layers.
    s_dim, h_dim, num_layers = 2, 32, 2

    key = jax.random.PRNGKey(0)
    k_state, k_state2, k_params = jax.random.split(key, 3)
    padded_params, raw_params = init_params(k_params, s_dim, h_dim, num_layers)

    # Case 1: small batch (single 128-row tile, grid=(1,)).
    batch = 64
    state = jax.random.normal(k_state, (batch, s_dim), jnp.float32)
    out = local_net_v_forward(state, padded_params, num_layers=num_layers)
    out = jax.block_until_ready(out)
    ref = reference_forward(state, raw_params, num_layers=num_layers)
    assert out.shape == (batch, 1)
    # bf16 MXU operands -> looser tolerance vs. the f32 reference.
    assert jnp.allclose(out, ref, atol=2e-2, rtol=2e-2)

    # Case 2: batch that does not divide the tile -> 2-step parallel grid,
    # padded rows sliced off (exercises the multi-tile / megacore path).
    batch2 = 300
    state2 = jax.random.normal(k_state2, (batch2, s_dim), jnp.float32)
    out2 = local_net_v_forward(state2, padded_params, num_layers=num_layers)
    out2 = jax.block_until_ready(out2)
    ref2 = reference_forward(state2, raw_params, num_layers=num_layers)
    assert out2.shape == (batch2, 1)
    assert jnp.allclose(out2, ref2, atol=2e-2, rtol=2e-2)

    print("KERNEL_OK")
</pallas_src>

<mosaic_0001>
module attributes {stable_mosaic.version = 11 : i64} {
  func.func @_local_net_v_kernel(%arg0: i32, %arg1: memref<128x2xf32, #tpu.memory_space<vmem>>, %arg2: memref<2x128xf32, #tpu.memory_space<vmem>>, %arg3: memref<1x128xf32, #tpu.memory_space<vmem>>, %arg4: memref<2x128x128xbf16, #tpu.memory_space<vmem>>, %arg5: memref<2x1x128xf32, #tpu.memory_space<vmem>>, %arg6: memref<1x128xbf16, #tpu.memory_space<vmem>>, %arg7: memref<1xf32, #tpu.memory_space<smem>>, %arg8: memref<1x128xf32, #tpu.memory_space<vmem>>) attributes {dimension_semantics = [#tpu.dimension_semantics<parallel>], iteration_bounds = array<i64: 1>, scalar_prefetch = 0 : i64, scratch_operands = 0 : i64, tpu.core_type = #tpu.core_type<tc>, window_params = [{transform_indices = @transform_0, window_bounds = array<i64: 128, 2>}, {pipeline_mode = #tpu.pipeline_mode<synchronous>, transform_indices = @transform_1, window_bounds = array<i64: 2, 128>}, {pipeline_mode = #tpu.pipeline_mode<synchronous>, transform_indices = @transform_2, window_bounds = array<i64: 1, 128>}, {pipeline_mode = #tpu.pipeline_mode<synchronous>, transform_indices = @transform_3, window_bounds = array<i64: 2, 128, 128>}, {pipeline_mode = #tpu.pipeline_mode<synchronous>, transform_indices = @transform_4, window_bounds = array<i64: 2, 1, 128>}, {pipeline_mode = #tpu.pipeline_mode<synchronous>, transform_indices = @transform_5, window_bounds = array<i64: 1, 128>}, {transform_indices = @transform_6, window_bounds = array<i64: 1>}, {transform_indices = @transform_7, window_bounds = array<i64: 1, 128>}]} {
    %c0 = arith.constant 0 : index
    %c0_0 = arith.constant 0 : index
    %0 = vector.load %arg1[%c0, %c0_0] : memref<128x2xf32, #tpu.memory_space<vmem>>, vector<128x2xf32>
    %c0_1 = arith.constant 0 : index
    %c0_2 = arith.constant 0 : index
    %1 = vector.load %arg3[%c0_1, %c0_2] : memref<1x128xf32, #tpu.memory_space<vmem>>, vector<1x128xf32>
    %2 = vector.shape_cast %1 : vector<1x128xf32> to vector<1x128xf32>
    %3 = vector.broadcast %2 : vector<1x128xf32> to vector<128x128xf32>
    %4 = vector.extract_strided_slice %0 {offsets = [0, 0], sizes = [128, 1], strides = [1, 1]} : vector<128x2xf32> to vector<128x1xf32>
    %c0_3 = arith.constant 0 : index
    %c0_4 = arith.constant 0 : index
    %5 = vector.load %arg2[%c0_3, %c0_4] : memref<2x128xf32, #tpu.memory_space<vmem>>, vector<1x128xf32>
    %6 = vector.broadcast %4 : vector<128x1xf32> to vector<128x128xf32>
    %7 = vector.broadcast %5 : vector<1x128xf32> to vector<128x128xf32>
    %8 = arith.mulf %6, %7 : vector<128x128xf32>
    %9 = arith.addf %3, %8 : vector<128x128xf32>
    %10 = vector.extract_strided_slice %0 {offsets = [0, 1], sizes = [128, 1], strides = [1, 1]} : vector<128x2xf32> to vector<128x1xf32>
    %c1 = arith.constant 1 : index
    %c0_5 = arith.constant 0 : index
    %11 = vector.load %arg2[%c1, %c0_5] : memref<2x128xf32, #tpu.memory_space<vmem>>, vector<1x128xf32>
    %12 = vector.broadcast %10 : vector<128x1xf32> to vector<128x128xf32>
    %13 = vector.broadcast %11 : vector<1x128xf32> to vector<128x128xf32>
    %14 = arith.mulf %12, %13 : vector<128x128xf32>
    %15 = arith.addf %9, %14 : vector<128x128xf32>
    %cst = arith.constant 0.000000e+00 : f32
    %16 = vector.broadcast %cst : f32 to vector<128x128xf32>
    %17 = arith.maximumf %15, %16 : vector<128x128xf32>
    %18 = arith.truncf %17 : vector<128x128xf32> to vector<128x128xbf16>
    %c0_6 = arith.constant 0 : index
    %c0_7 = arith.constant 0 : index
    %c0_8 = arith.constant 0 : index
    %19 = vector.load %arg4[%c0_6, %c0_7, %c0_8] : memref<2x128x128xbf16, #tpu.memory_space<vmem>>, vector<1x128x128xbf16>
    %20 = vector.shape_cast %19 : vector<1x128x128xbf16> to vector<128x128xbf16>
    %cst_9 = arith.constant dense<0.000000e+00> : vector<128x128xf32>
    %21 = tpu.matmul %18, %20, %cst_9 {dimension_numbers = #tpu.dot_dimension_numbers<[1], [0], [0], [1], [0, 0, 1, 1], [], []>} : vector<128x128xbf16>, vector<128x128xbf16>, vector<128x128xf32> -> vector<128x128xf32>
    %c0_10 = arith.constant 0 : index
    %c0_11 = arith.constant 0 : index
    %c0_12 = arith.constant 0 : index
    %22 = vector.load %arg5[%c0_10, %c0_11, %c0_12] : memref<2x1x128xf32, #tpu.memory_space<vmem>>, vector<1x1x128xf32>
    %23 = vector.shape_cast %22 : vector<1x1x128xf32> to vector<1x128xf32>
    %24 = vector.broadcast %23 : vector<1x128xf32> to vector<128x128xf32>
    %25 = arith.addf %21, %24 : vector<128x128xf32>
    %cst_13 = arith.constant 0.000000e+00 : f32
    %26 = vector.broadcast %cst_13 : f32 to vector<128x128xf32>
    %27 = arith.maximumf %25, %26 : vector<128x128xf32>
    %28 = arith.truncf %27 : vector<128x128xf32> to vector<128x128xbf16>
    %c1_14 = arith.constant 1 : index
    %c0_15 = arith.constant 0 : index
    %c0_16 = arith.constant 0 : index
    %29 = vector.load %arg4[%c1_14, %c0_15, %c0_16] : memref<2x128x128xbf16, #tpu.memory_space<vmem>>, vector<1x128x128xbf16>
    %30 = vector.shape_cast %29 : vector<1x128x128xbf16> to vector<128x128xbf16>
    %cst_17 = arith.constant dense<0.000000e+00> : vector<128x128xf32>
    %31 = tpu.matmul %28, %30, %cst_17 {dimension_numbers = #tpu.dot_dimension_numbers<[1], [0], [0], [1], [0, 0, 1, 1], [], []>} : vector<128x128xbf16>, vector<128x128xbf16>, vector<128x128xf32> -> vector<128x128xf32>
    %c1_18 = arith.constant 1 : index
    %c0_19 = arith.constant 0 : index
    %c0_20 = arith.constant 0 : index
    %32 = vector.load %arg5[%c1_18, %c0_19, %c0_20] : memref<2x1x128xf32, #tpu.memory_space<vmem>>, vector<1x1x128xf32>
    %33 = vector.shape_cast %32 : vector<1x1x128xf32> to vector<1x128xf32>
    %34 = vector.broadcast %33 : vector<1x128xf32> to vector<128x128xf32>
    %35 = arith.addf %31, %34 : vector<128x128xf32>
    %cst_21 = arith.constant 0.000000e+00 : f32
    %36 = vector.broadcast %cst_21 : f32 to vector<128x128xf32>
    %37 = arith.maximumf %35, %36 : vector<128x128xf32>
    %c0_22 = arith.constant 0 : index
    %c0_23 = arith.constant 0 : index
    %38 = vector.load %arg6[%c0_22, %c0_23] : memref<1x128xbf16, #tpu.memory_space<vmem>>, vector<1x128xbf16>
    %c0_24 = arith.constant 0 : index
    %39 = memref.load %arg7[%c0_24] : memref<1xf32, #tpu.memory_space<smem>>
    %40 = arith.truncf %37 : vector<128x128xf32> to vector<128x128xbf16>
    %cst_25 = arith.constant dense<0.000000e+00> : vector<1x128xf32>
    %41 = tpu.matmul %38, %40, %cst_25 {dimension_numbers = #tpu.dot_dimension_numbers<[1], [1], [0], [0], [0, 0, 1, 0], [], []>} : vector<1x128xbf16>, vector<128x128xbf16>, vector<1x128xf32> -> vector<1x128xf32>
    %42 = vector.broadcast %39 : f32 to vector<1x128xf32>
    %43 = arith.addf %41, %42 : vector<1x128xf32>
    %c0_26 = arith.constant 0 : index
    %c0_27 = arith.constant 0 : index
    %44 = vector.load %arg8[%c0_26, %c0_27] : memref<1x128xf32, #tpu.memory_space<vmem>>, vector<1x128xf32>
    tpu.vector_store %arg8[%c0_26, %c0_27], %43 {strides = array<i32>} : memref<1x128xf32, #tpu.memory_space<vmem>>, vector<1x128xf32>,
    return
  }
  func.func @transform_0(%arg0: i32) -> (i32, i32) {
    %c0_i32 = arith.constant 0 : i32
    %c0_i32_0 = arith.constant 0 : i32
    return %arg0, %c0_i32 : i32, i32
  }
  func.func @transform_1(%arg0: i32) -> (i32, i32) {
    %c0_i32 = arith.constant 0 : i32
    %c0_i32_0 = arith.constant 0 : i32
    %c0_i32_1 = arith.constant 0 : i32
    return %c0_i32, %c0_i32_0 : i32, i32
  }
  func.func @transform_2(%arg0: i32) -> (i32, i32) {
    %c0_i32 = arith.constant 0 : i32
    %c0_i32_0 = arith.constant 0 : i32
    %c0_i32_1 = arith.constant 0 : i32
    return %c0_i32, %c0_i32_0 : i32, i32
  }
  func.func @transform_3(%arg0: i32) -> (i32, i32, i32) {
    %c0_i32 = arith.constant 0 : i32
    %c0_i32_0 = arith.constant 0 : i32
    %c0_i32_1 = arith.constant 0 : i32
    %c0_i32_2 = arith.constant 0 : i32
    return %c0_i32, %c0_i32_0, %c0_i32_1 : i32, i32, i32
  }
  func.func @transform_4(%arg0: i32) -> (i32, i32, i32) {
    %c0_i32 = arith.constant 0 : i32
    %c0_i32_0 = arith.constant 0 : i32
    %c0_i32_1 = arith.constant 0 : i32
    %c0_i32_2 = arith.constant 0 : i32
    return %c0_i32, %c0_i32_0, %c0_i32_1 : i32, i32, i32
  }
  func.func @transform_5(%arg0: i32) -> (i32, i32) {
    %c0_i32 = arith.constant 0 : i32
    %c0_i32_0 = arith.constant 0 : i32
    %c0_i32_1 = arith.constant 0 : i32
    return %c0_i32, %c0_i32_0 : i32, i32
  }
  func.func @transform_6(%arg0: i32) -> i32 {
    %c0_i32 = arith.constant 0 : i32
    %c0_i32_0 = arith.constant 0 : i32
    return %c0_i32 : i32
  }
  func.func @transform_7(%arg0: i32) -> (i32, i32) {
    %c0_i32 = arith.constant 0 : i32
    %c0_i32_0 = arith.constant 0 : i32
    return %arg0, %c0_i32 : i32, i32
  }
}

</mosaic_0001>

<llo_original>
// kernel: tpu_custom_call.1
$region0: #{tpu_custom_call.1}
  #allocation0 [shape = 'u32[]', space=smem, size = 0x4, offset = 0x4, fixed_abs, tag = 'smem constant byte address 0x4 - core index']
  #allocation1 [shape = 'u32[72,128]{1,0:T(1,128)}', space=vmem, size = 0x9000, scoped, tag = 'internal scratch']
  #allocation2 [shape = 'f32[1]{0:T(128)S(6)}', space=smem, size = 0x200, scoped, tag = 'scoped memory for tpu_custom_call.1']
  %s0 = inlined_call_operand.vmem [shape: f32[128,2], index: 0, kind: input, shape index: {}]
  %s1 = inlined_call_operand.vmem [shape: f32[2,128], index: 1, kind: input, shape index: {}]
  %s2 = inlined_call_operand.vmem [shape: f32[1,128], index: 2, kind: input, shape index: {}]
  %s3 = inlined_call_operand.vmem [shape: bf16[2,128,128], index: 3, kind: input, shape index: {}]
  %s4 = inlined_call_operand.vmem [shape: f32[2,1,128], index: 4, kind: input, shape index: {}]
  %s5 = inlined_call_operand.hbm [shape: bf16[1,128], index: 5, kind: input, shape index: {}]
  %s6 = inlined_call_operand.<no memory space> [shape: f32[1], index: 6, kind: input, shape index: {}]
  %s7 = inlined_call_operand.hbm [shape: f32[1,128], index: 7, kind: output, shape index: {}]
  %s8 = sld [smem:[#allocation0]]
  $region42: #{tpu_custom_call.1} parent=0
    _
  %s10 = ssub.s32 1, %s8
  %s11 = scalar_select 0, %s10, %s8
  %12 = sst [smem:[#allocation2]] %s6
  $region1: #{tpu_custom_call.1} parent=0
    #allocation3 [shape = 'u8[512]{0}', space=vmem, size = 0x400, scoped, tag = 'input window, operand 5, single buffered']
    #allocation4 [shape = 's32[1]{0}', space=sflag, size = 0x4, scoped, tag = 'scoped memory for tpu_custom_call.1']
    #allocation5 [shape = 's32[1]{0}', space=sflag, size = 0x4, scoped, tag = 'scoped memory for tpu_custom_call.1']
    #allocation6 [shape = 'u8[512]{0}', space=vmem, size = 0x400, scoped, tag = 'output window, operand 0, single buffered']
    %13 = vsyncpa [#allocation4], 0
    %14 = vsyncpa [#allocation5], 0
    // Predicated region
    $region2: #{tpu_custom_call.1} parent=1 // pred_check
      _
    $region3: #{tpu_custom_call.1} parent=1 // pred_check_branch
      %16 = sbr.rel (0) target = $region5
    $region4: #{tpu_custom_call.1} parent=1 // pred_region
      _
    $region5: #{tpu_custom_call.1} parent=1 // pred_fallthru
      _
    // Predicated region
    $region6: #{tpu_custom_call.1} parent=1 // pred_check
      _
    $region7: #{tpu_custom_call.1} parent=1 // pred_check_branch
      %18 = sbr.rel (0) target = $region9
    $region8: #{tpu_custom_call.1} parent=1 // pred_region
      _
    $region9: #{tpu_custom_call.1} parent=1 // pred_fallthru
      _
    // Predicated region
    $region10: #{tpu_custom_call.1} parent=1 // pred_check
      _
    $region11: #{tpu_custom_call.1} parent=1 // pred_check_branch
      %20 = sbr.rel (0) target = $region13
    $region12: #{tpu_custom_call.1} parent=1 // pred_region
      _
    $region13: #{tpu_custom_call.1} parent=1 // pred_fallthru
      _
    // Predicated region
    $region14: #{tpu_custom_call.1} parent=1 // pred_check
      _
    $region15: #{tpu_custom_call.1} parent=1 // pred_check_branch
      %22 = sbr.rel (0) target = $region17
    $region16: #{tpu_custom_call.1} parent=1 // pred_region
      _
    $region17: #{tpu_custom_call.1} parent=1 // pred_fallthru
      _
    // Predicated region
    $region18: #{tpu_custom_call.1} parent=1 // pred_check
      _
    $region19: #{tpu_custom_call.1} parent=1 // pred_check_branch
      %24 = sbr.rel (0) target = $region21
    $region20: #{tpu_custom_call.1} parent=1 // pred_region
      _
    $region21: #{tpu_custom_call.1} parent=1 // pred_fallthru
      _
    // Predicated region
    $region22: #{tpu_custom_call.1} parent=1 // pred_check
      _
    $region23: #{tpu_custom_call.1} parent=1 // pred_check_branch
      %26 = sbr.rel (0) target = $region25
    $region24: #{tpu_custom_call.1} parent=1 // pred_region
      %28 = vsyncadd [#allocation4], 0
      %s30 = sshll.u32 %s5, 4
      %s31 = int_to_ptr.hbm [resolvable:$true] %s30
      %s32 = sshll.u32 [#allocation3], 4
      %s33 = int_to_ptr.vmem [resolvable:$true] %s32
      %35 = dma.hbm_to_vmem [thread:$0]  %s31, 16, %s33, [#allocation4]
    $region25: #{tpu_custom_call.1} parent=1 // pred_fallthru
      _
    // Predicated region
    $region26: #{tpu_custom_call.1} parent=1 // pred_check
      _
    $region27: #{tpu_custom_call.1} parent=1 // pred_check_branch
      %37 = sbr.rel (0) target = $region29
    $region28: #{tpu_custom_call.1} parent=1 // pred_region
      _
    $region29: #{tpu_custom_call.1} parent=1 // pred_fallthru
      _
    // Predicated region
    $region30: #{tpu_custom_call.1} parent=1 // pred_check
      _
    $region31: #{tpu_custom_call.1} parent=1 // pred_check_branch
      %39 = sbr.rel (0) target = $region33
    $region32: #{tpu_custom_call.1} parent=1 // pred_region
      %41 = dma.done [#allocation4], 16
    $region33: #{tpu_custom_call.1} parent=1 // pred_fallthru
      _
    %v42 = vld [vmem:[%s0] sm:$0xff]
    %v43 = vld [vmem:[%s0 + $0x8] sm:$0xff]
    %v44 = vld [vmem:[%s0 + $0x10] sm:$0xff]
    %v45 = vld [vmem:[%s0 + $0x18] sm:$0xff]
    %v46 = vld [vmem:[%s0 + $0x20] sm:$0xff]
    %v47 = vld [vmem:[%s0 + $0x28] sm:$0xff]
    %v48 = vld [vmem:[%s0 + $0x30] sm:$0xff]
    %v49 = vld [vmem:[%s0 + $0x38] sm:$0xff]
    %v50 = vld [vmem:[%s0 + $0x40] sm:$0xff]
    %v51 = vld [vmem:[%s0 + $0x48] sm:$0xff]
    %v52 = vld [vmem:[%s0 + $0x50] sm:$0xff]
    %v53 = vld [vmem:[%s0 + $0x58] sm:$0xff]
    %v54 = vld [vmem:[%s0 + $0x60] sm:$0xff]
    %v55 = vld [vmem:[%s0 + $0x68] sm:$0xff]
    %v56 = vld [vmem:[%s0 + $0x70] sm:$0xff]
    %v57 = vld [vmem:[%s0 + $0x78] sm:$0xff]
    %v58 = vld [vmem:[%s2] sm:$0x1]
    %v60 = vperm.slane %v58, 0
    %v62 = vld [vmem:[%s1] sm:$0x1]
    %64 = vset.pattern.permute.xlu0 0
    %65 = vperm.xlu0 %64, %v42
    %v66 = vpop.permute.xlu0 %65
    %69 = vset.pattern.permute.xlu0 0
    %70 = vperm.xlu0 %69, %v43
    %v71 = vpop.permute.xlu0 %70
    %74 = vset.pattern.permute.xlu0 0
    %75 = vperm.xlu0 %74, %v44
    %v76 = vpop.permute.xlu0 %75
    %79 = vset.pattern.permute.xlu0 0
    %80 = vperm.xlu0 %79, %v45
    %v81 = vpop.permute.xlu0 %80
    %84 = vset.pattern.permute.xlu0 0
    %85 = vperm.xlu0 %84, %v46
    %v86 = vpop.permute.xlu0 %85
    %89 = vset.pattern.permute.xlu0 0
    %90 = vperm.xlu0 %89, %v47
    %v91 = vpop.permute.xlu0 %90
    %94 = vset.pattern.permute.xlu0 0
    %95 = vperm.xlu0 %94, %v48
    %v96 = vpop.permute.xlu0 %95
    %99 = vset.pattern.permute.xlu0 0
    %100 = vperm.xlu0 %99, %v49
    %v101 = vpop.permute.xlu0 %100
    %104 = vset.pattern.permute.xlu0 0
    %105 = vperm.xlu0 %104, %v50
    %v106 = vpop.permute.xlu0 %105
    %109 = vset.pattern.permute.xlu0 0
    %110 = vperm.xlu0 %109, %v51
    %v111 = vpop.permute.xlu0 %110
    %114 = vset.pattern.permute.xlu0 0
    %115 = vperm.xlu0 %114, %v52
    %v116 = vpop.permute.xlu0 %115
    %119 = vset.pattern.permute.xlu0 0
    %120 = vperm.xlu0 %119, %v53
    %v121 = vpop.permute.xlu0 %120
    %124 = vset.pattern.permute.xlu0 0
    %125 = vperm.xlu0 %124, %v54
    %v126 = vpop.permute.xlu0 %125
    %129 = vset.pattern.permute.xlu0 0
    %130 = vperm.xlu0 %129, %v55
    %v131 = vpop.permute.xlu0 %130
    %134 = vset.pattern.permute.xlu0 0
    %135 = vperm.xlu0 %134, %v56
    %v136 = vpop.permute.xlu0 %135
    %139 = vset.pattern.permute.xlu0 0
    %140 = vperm.xlu0 %139, %v57
    %v141 = vpop.permute.xlu0 %140
    %v143 = vperm.slane %v62, 0
    %v144 = vmul.f32 %v66, %v143
    %v145 = vmul.f32 %v71, %v143
    %v146 = vmul.f32 %v76, %v143
    %v147 = vmul.f32 %v81, %v143
    %v148 = vmul.f32 %v86, %v143
    %v149 = vmul.f32 %v91, %v143
    %v150 = vmul.f32 %v96, %v143
    %v151 = vmul.f32 %v101, %v143
    %v152 = vmul.f32 %v106, %v143
    %v153 = vmul.f32 %v111, %v143
    %v154 = vmul.f32 %v116, %v143
    %v155 = vmul.f32 %v121, %v143
    %v156 = vmul.f32 %v126, %v143
    %v157 = vmul.f32 %v131, %v143
    %v158 = vmul.f32 %v136, %v143
    %v159 = vmul.f32 %v141, %v143
    %v160 = vadd.f32 %v60, %v144
    %v161 = vadd.f32 %v60, %v145
    %v162 = vadd.f32 %v60, %v146
    %v163 = vadd.f32 %v60, %v147
    %v164 = vadd.f32 %v60, %v148
    %v165 = vadd.f32 %v60, %v149
    %v166 = vadd.f32 %v60, %v150
    %v167 = vadd.f32 %v60, %v151
    %v168 = vadd.f32 %v60, %v152
    %v169 = vadd.f32 %v60, %v153
    %v170 = vadd.f32 %v60, %v154
    %v171 = vadd.f32 %v60, %v155
    %v172 = vadd.f32 %v60, %v156
    %v173 = vadd.f32 %v60, %v157
    %v174 = vadd.f32 %v60, %v158
    %v175 = vadd.f32 %v60, %v159
    %v176 = vld [vmem:[%s1 + $0x1] sm:$0x1]
    %177 = vset.pattern.permute.xlu0 1
    %178 = vperm.xlu0 %177, %v42
    %v179 = vpop.permute.xlu0 %178
    %181 = vset.pattern.permute.xlu0 1
    %182 = vperm.xlu0 %181, %v43
    %v183 = vpop.permute.xlu0 %182
    %185 = vset.pattern.permute.xlu0 1
    %186 = vperm.xlu0 %185, %v44
    %v187 = vpop.permute.xlu0 %186
    %189 = vset.pattern.permute.xlu0 1
    %190 = vperm.xlu0 %189, %v45
    %v191 = vpop.permute.xlu0 %190
    %193 = vset.pattern.permute.xlu0 1
    %194 = vperm.xlu0 %193, %v46
    %v195 = vpop.permute.xlu0 %194
    %197 = vset.pattern.permute.xlu0 1
    %198 = vperm.xlu0 %197, %v47
    %v199 = vpop.permute.xlu0 %198
    %201 = vset.pattern.permute.xlu0 1
    %202 = vperm.xlu0 %201, %v48
    %v203 = vpop.permute.xlu0 %202
    %205 = vset.pattern.permute.xlu0 1
    %206 = vperm.xlu0 %205, %v49
    %v207 = vpop.permute.xlu0 %206
    %209 = vset.pattern.permute.xlu0 1
    %210 = vperm.xlu0 %209, %v50
    %v211 = vpop.permute.xlu0 %210
    %213 = vset.pattern.permute.xlu0 1
    %214 = vperm.xlu0 %213, %v51
    %v215 = vpop.permute.xlu0 %214
    %217 = vset.pattern.permute.xlu0 1
    %218 = vperm.xlu0 %217, %v52
    %v219 = vpop.permute.xlu0 %218
    %221 = vset.pattern.permute.xlu0 1
    %222 = vperm.xlu0 %221, %v53
    %v223 = vpop.permute.xlu0 %222
    %225 = vset.pattern.permute.xlu0 1
    %226 = vperm.xlu0 %225, %v54
    %v227 = vpop.permute.xlu0 %226
    %229 = vset.pattern.permute.xlu0 1
    %230 = vperm.xlu0 %229, %v55
    %v231 = vpop.permute.xlu0 %230
    %233 = vset.pattern.permute.xlu0 1
    %234 = vperm.xlu0 %233, %v56
    %v235 = vpop.permute.xlu0 %234
    %237 = vset.pattern.permute.xlu0 1
    %238 = vperm.xlu0 %237, %v57
    %v239 = vpop.permute.xlu0 %238
    %v241 = vperm.slane %v176, 0
    %v242 = vmul.f32 %v179, %v241
    %v243 = vmul.f32 %v183, %v241
    %v244 = vmul.f32 %v187, %v241
    %v245 = vmul.f32 %v191, %v241
    %v246 = vmul.f32 %v195, %v241
    %v247 = vmul.f32 %v199, %v241
    %v248 = vmul.f32 %v203, %v241
    %v249 = vmul.f32 %v207, %v241
    %v250 = vmul.f32 %v211, %v241
    %v251 = vmul.f32 %v215, %v241
    %v252 = vmul.f32 %v219, %v241
    %v253 = vmul.f32 %v223, %v241
    %v254 = vmul.f32 %v227, %v241
    %v255 = vmul.f32 %v231, %v241
    %v256 = vmul.f32 %v235, %v241
    %v257 = vmul.f32 %v239, %v241
    %v258 = vadd.f32 %v160, %v242
    %v259 = vadd.f32 %v161, %v243
    %v260 = vadd.f32 %v162, %v244
    %v261 = vadd.f32 %v163, %v245
    %v262 = vadd.f32 %v164, %v246
    %v263 = vadd.f32 %v165, %v247
    %v264 = vadd.f32 %v166, %v248
    %v265 = vadd.f32 %v167, %v249
    %v266 = vadd.f32 %v168, %v250
    %v267 = vadd.f32 %v169, %v251
    %v268 = vadd.f32 %v170, %v252
    %v269 = vadd.f32 %v171, %v253
    %v270 = vadd.f32 %v172, %v254
    %v271 = vadd.f32 %v173, %v255
    %v272 = vadd.f32 %v174, %v256
    %v273 = vadd.f32 %v175, %v257
    %v274 = vmax.f32 %v258, 0.0
    %v275 = vmax.f32 %v259, 0.0
    %v276 = vmax.f32 %v260, 0.0
    %v277 = vmax.f32 %v261, 0.0
    %v278 = vmax.f32 %v262, 0.0
    %v279 = vmax.f32 %v263, 0.0
    %v280 = vmax.f32 %v264, 0.0
    %v281 = vmax.f32 %v265, 0.0
    %v282 = vmax.f32 %v266, 0.0
    %v283 = vmax.f32 %v267, 0.0
    %v284 = vmax.f32 %v268, 0.0
    %v285 = vmax.f32 %v269, 0.0
    %v286 = vmax.f32 %v270, 0.0
    %v287 = vmax.f32 %v271, 0.0
    %v288 = vmax.f32 %v272, 0.0
    %v289 = vmax.f32 %v273, 0.0
    %v290 = vpack.c.bf16 %v275, %v274
    %v291 = vpack.c.bf16 %v277, %v276
    %v292 = vpack.c.bf16 %v279, %v278
    %v293 = vpack.c.bf16 %v281, %v280
    %v294 = vpack.c.bf16 %v283, %v282
    %v295 = vpack.c.bf16 %v285, %v284
    %v296 = vpack.c.bf16 %v287, %v286
    %v297 = vpack.c.bf16 %v289, %v288
    %v298 = vld [vmem:[%s3] sm:$0xf]
    %v299 = vld [vmem:[%s3 + $0x4] sm:$0xf]
    %v300 = vld [vmem:[%s3 + $0x8] sm:$0xf]
    %v301 = vld [vmem:[%s3 + $0xc] sm:$0xf]
    %v302 = vld [vmem:[%s3 + $0x10] sm:$0xf]
    %v303 = vld [vmem:[%s3 + $0x14] sm:$0xf]
    %v304 = vld [vmem:[%s3 + $0x18] sm:$0xf]
    %v305 = vld [vmem:[%s3 + $0x1c] sm:$0xf]
    %v306 = vld [vmem:[%s3 + $0x20] sm:$0xf]
    %v307 = vld [vmem:[%s3 + $0x24] sm:$0xf]
    %v308 = vld [vmem:[%s3 + $0x28] sm:$0xf]
    %v309 = vld [vmem:[%s3 + $0x2c] sm:$0xf]
    %v310 = vld [vmem:[%s3 + $0x30] sm:$0xf]
    %v311 = vld [vmem:[%s3 + $0x34] sm:$0xf]
    %v312 = vld [vmem:[%s3 + $0x38] sm:$0xf]
    %v313 = vld [vmem:[%s3 + $0x3c] sm:$0xf]
    %v314 = vld [vmem:[%s4] sm:$0x1]
    %v316 = vperm.slane %v314, 0
    %v334 = vunpack.c.l.b16 %v298
    %v335 = vunpack.c.l.b16 %v299
    %v336 = vunpack.c.l.b16 %v300
    %v337 = vunpack.c.l.b16 %v301
    %v338 = vunpack.c.l.b16 %v302
    %v339 = vunpack.c.l.b16 %v303
    %v340 = vunpack.c.l.b16 %v304
    %v341 = vunpack.c.l.b16 %v305
    %v342 = vunpack.c.l.b16 %v306
    %v343 = vunpack.c.l.b16 %v307
    %v344 = vunpack.c.l.b16 %v308
    %v345 = vunpack.c.l.b16 %v309
    %v346 = vunpack.c.l.b16 %v310
    %v347 = vunpack.c.l.b16 %v311
    %v348 = vunpack.c.l.b16 %v312
    %v349 = vunpack.c.l.b16 %v313
    %v350 = vpack.c.b16 %v335, %v334
    %v351 = vpack.c.b16 %v337, %v336
    %v352 = vpack.c.b16 %v339, %v338
    %v353 = vpack.c.b16 %v341, %v340
    %v354 = vpack.c.b16 %v343, %v342
    %v355 = vpack.c.b16 %v345, %v344
    %v356 = vpack.c.b16 %v347, %v346
    %v357 = vpack.c.b16 %v349, %v348
    %366 = vmatpush.bf16.msra.mxu0 %v357
    %367 = vmatpush.bf16.msra.mxu0 %v356
    %368 = vmatpush.bf16.msra.mxu0 %v355
    %369 = vmatpush.bf16.msra.mxu0 %v354
    %370 = vmatpush.bf16.msra.mxu0 %v353
    %371 = vmatpush.bf16.msra.mxu0 %v352
    %372 = vmatpush.bf16.msra.mxu0 %v351
    %373 = vmatpush.bf16.msra.mxu0 %v350
    %374 = vmatmul.bf16.gmra.mxu0 %v290
    %v375 = vpop.f32.mrf.mxu0
    %v376 = vadd.f32 %v316, %v375
    %v377 = vpop.f32.mrf.mxu0
    %v378 = vadd.f32 %v316, %v377
    %379 = vmatmul.bf16.gmra.mxu0 %v291
    %v380 = vpop.f32.mrf.mxu0
    %v381 = vadd.f32 %v316, %v380
    %v382 = vpop.f32.mrf.mxu0
    %v383 = vadd.f32 %v316, %v382
    %384 = vmatmul.bf16.gmra.mxu0 %v292
    %v385 = vpop.f32.mrf.mxu0
    %v386 = vadd.f32 %v316, %v385
    %v387 = vpop.f32.mrf.mxu0
    %v388 = vadd.f32 %v316, %v387
    %389 = vmatmul.bf16.gmra.mxu0 %v293
    %v390 = vpop.f32.mrf.mxu0
    %v391 = vadd.f32 %v316, %v390
    %v392 = vpop.f32.mrf.mxu0
    %v393 = vadd.f32 %v316, %v392
    %394 = vmatmul.bf16.gmra.mxu0 %v294
    %v395 = vpop.f32.mrf.mxu0
    %v396 = vadd.f32 %v316, %v395
    %v397 = vpop.f32.mrf.mxu0
    %v398 = vadd.f32 %v316, %v397
    %399 = vmatmul.bf16.gmra.mxu0 %v295
    %v400 = vpop.f32.mrf.mxu0
    %v401 = vadd.f32 %v316, %v400
    %v402 = vpop.f32.mrf.mxu0
    %v403 = vadd.f32 %v316, %v402
    %404 = vmatmul.bf16.gmra.mxu0 %v296
    %v405 = vpop.f32.mrf.mxu0
    %v406 = vadd.f32 %v316, %v405
    %v407 = vpop.f32.mrf.mxu0
    %v408 = vadd.f32 %v316, %v407
    %409 = vmatmul.bf16.gmra.mxu0 %v297
    %v410 = vpop.f32.mrf.mxu0
    %v411 = vadd.f32 %v316, %v410
    %v412 = vpop.f32.mrf.mxu0
    %v413 = vadd.f32 %v316, %v412
    %414 = vdwg.mxu0
    %v415 = vmax.f32 %v376, 0.0
    %v416 = vmax.f32 %v378, 0.0
    %v417 = vmax.f32 %v381, 0.0
    %v418 = vmax.f32 %v383, 0.0
    %v419 = vmax.f32 %v386, 0.0
    %v420 = vmax.f32 %v388, 0.0
    %v421 = vmax.f32 %v391, 0.0
    %v422 = vmax.f32 %v393, 0.0
    %v423 = vmax.f32 %v396, 0.0
    %v424 = vmax.f32 %v398, 0.0
    %v425 = vmax.f32 %v401, 0.0
    %v426 = vmax.f32 %v403, 0.0
    %v427 = vmax.f32 %v406, 0.0
    %v428 = vmax.f32 %v408, 0.0
    %v429 = vmax.f32 %v411, 0.0
    %v430 = vmax.f32 %v413, 0.0
    %v431 = vpack.c.bf16 %v416, %v415
    %v432 = vpack.c.bf16 %v418, %v417
    %v433 = vpack.c.bf16 %v420, %v419
    %v434 = vpack.c.bf16 %v422, %v421
    %v435 = vpack.c.bf16 %v424, %v423
    %v436 = vpack.c.bf16 %v426, %v425
    %v437 = vpack.c.bf16 %v428, %v427
    %v438 = vpack.c.bf16 %v430, %v429
    %s439 = scalar_lea.vmem %s3, 64
    %v440 = vld [vmem:[%s439] sm:$0xf]
    %v441 = vld [vmem:[%s439 + $0x4] sm:$0xf]
    %v442 = vld [vmem:[%s439 + $0x8] sm:$0xf]
    %v443 = vld [vmem:[%s439 + $0xc] sm:$0xf]
    %v444 = vld [vmem:[%s439 + $0x10] sm:$0xf]
    %v445 = vld [vmem:[%s439 + $0x14] sm:$0xf]
    %v446 = vld [vmem:[%s439 + $0x18] sm:$0xf]
    %v447 = vld [vmem:[%s439 + $0x1c] sm:$0xf]
    %v448 = vld [vmem:[%s439 + $0x20] sm:$0xf]
    %v449 = vld [vmem:[%s439 + $0x24] sm:$0xf]
    %v450 = vld [vmem:[%s439 + $0x28] sm:$0xf]
    %v451 = vld [vmem:[%s439 + $0x2c] sm:$0xf]
    %v452 = vld [vmem:[%s439 + $0x30] sm:$0xf]
    %v453 = vld [vmem:[%s439 + $0x34] sm:$0xf]
    %v454 = vld [vmem:[%s439 + $0x38] sm:$0xf]
    %v455 = vld [vmem:[%s439 + $0x3c] sm:$0xf]
    %s456 = scalar_lea.vmem %s4, 1
    %v457 = vld [vmem:[%s456] sm:$0x1]
    %v459 = vperm.slane %v457, 0
    %v477 = vunpack.c.l.b16 %v440
    %v478 = vunpack.c.l.b16 %v441
    %v479 = vunpack.c.l.b16 %v442
    %v480 = vunpack.c.l.b16 %v443
    %v481 = vunpack.c.l.b16 %v444
    %v482 = vunpack.c.l.b16 %v445
    %v483 = vunpack.c.l.b16 %v446
    %v484 = vunpack.c.l.b16 %v447
    %v485 = vunpack.c.l.b16 %v448
    %v486 = vunpack.c.l.b16 %v449
    %v487 = vunpack.c.l.b16 %v450
    %v488 = vunpack.c.l.b16 %v451
    %v489 = vunpack.c.l.b16 %v452
    %v490 = vunpack.c.l.b16 %v453
    %v491 = vunpack.c.l.b16 %v454
    %v492 = vunpack.c.l.b16 %v455
    %v493 = vpack.c.b16 %v478, %v477
    %v494 = vpack.c.b16 %v480, %v479
    %v495 = vpack.c.b16 %v482, %v481
    %v496 = vpack.c.b16 %v484, %v483
    %v497 = vpack.c.b16 %v486, %v485
    %v498 = vpack.c.b16 %v488, %v487
    %v499 = vpack.c.b16 %v490, %v489
    %v500 = vpack.c.b16 %v492, %v491
    %509 = vmatpush.bf16.msra.mxu0 %v500
    %510 = vmatpush.bf16.msra.mxu0 %v499
    %511 = vmatpush.bf16.msra.mxu0 %v498
    %512 = vmatpush.bf16.msra.mxu0 %v497
    %513 = vmatpush.bf16.msra.mxu0 %v496
    %514 = vmatpush.bf16.msra.mxu0 %v495
    %515 = vmatpush.bf16.msra.mxu0 %v494
    %516 = vmatpush.bf16.msra.mxu0 %v493
    %517 = vmatmul.bf16.gmra.mxu0 %v431
    %v518 = vpop.f32.mrf.mxu0
    %v519 = vadd.f32 %v459, %v518
    %v520 = vpop.f32.mrf.mxu0
    %v521 = vadd.f32 %v459, %v520
    %522 = vmatmul.bf16.gmra.mxu0 %v432
    %v523 = vpop.f32.mrf.mxu0
    %v524 = vadd.f32 %v459, %v523
    %v525 = vpop.f32.mrf.mxu0
    %v526 = vadd.f32 %v459, %v525
    %527 = vmatmul.bf16.gmra.mxu0 %v433
    %v528 = vpop.f32.mrf.mxu0
    %v529 = vadd.f32 %v459, %v528
    %v530 = vpop.f32.mrf.mxu0
    %v531 = vadd.f32 %v459, %v530
    %532 = vmatmul.bf16.gmra.mxu0 %v434
    %v533 = vpop.f32.mrf.mxu0
    %v534 = vadd.f32 %v459, %v533
    %v535 = vpop.f32.mrf.mxu0
    %v536 = vadd.f32 %v459, %v535
    %537 = vmatmul.bf16.gmra.mxu0 %v435
    %v538 = vpop.f32.mrf.mxu0
    %v539 = vadd.f32 %v459, %v538
    %v540 = vpop.f32.mrf.mxu0
    %v541 = vadd.f32 %v459, %v540
    %542 = vmatmul.bf16.gmra.mxu0 %v436
    %v543 = vpop.f32.mrf.mxu0
    %v544 = vadd.f32 %v459, %v543
    %v545 = vpop.f32.mrf.mxu0
    %v546 = vadd.f32 %v459, %v545
    %547 = vmatmul.bf16.gmra.mxu0 %v437
    %v548 = vpop.f32.mrf.mxu0
    %v549 = vadd.f32 %v459, %v548
    %v550 = vpop.f32.mrf.mxu0
    %v551 = vadd.f32 %v459, %v550
    %552 = vmatmul.bf16.gmra.mxu0 %v438
    %v553 = vpop.f32.mrf.mxu0
    %v554 = vadd.f32 %v459, %v553
    %v555 = vpop.f32.mrf.mxu0
    %v556 = vadd.f32 %v459, %v555
    %557 = vdwg.mxu0
    %v558 = vmax.f32 %v519, 0.0
    %v559 = vmax.f32 %v521, 0.0
    %v560 = vmax.f32 %v524, 0.0
    %v561 = vmax.f32 %v526, 0.0
    %v562 = vmax.f32 %v529, 0.0
    %v563 = vmax.f32 %v531, 0.0
    %v564 = vmax.f32 %v534, 0.0
    %v565 = vmax.f32 %v536, 0.0
    %v566 = vmax.f32 %v539, 0.0
    %v567 = vmax.f32 %v541, 0.0
    %v568 = vmax.f32 %v544, 0.0
    %v569 = vmax.f32 %v546, 0.0
    %v570 = vmax.f32 %v549, 0.0
    %v571 = vmax.f32 %v551, 0.0
    %v572 = vmax.f32 %v554, 0.0
    %v573 = vmax.f32 %v556, 0.0
    %v574 = vld [vmem:[#allocation3] sm:$0x1]
    %s575 = sld [smem:[#allocation2]]
    %v576 = vpack.c.bf16 %v559, %v558
    %v577 = vpack.c.bf16 %v561, %v560
    %v578 = vpack.c.bf16 %v563, %v562
    %v579 = vpack.c.bf16 %v565, %v564
    %v580 = vpack.c.bf16 %v567, %v566
    %v581 = vpack.c.bf16 %v569, %v568
    %v582 = vpack.c.bf16 %v571, %v570
    %v583 = vpack.c.bf16 %v573, %v572
    %v584 = vstv %s575
    %585 = vmatpush.bf16.xpose.msra.mxu0 %v583
    %586 = vmatpush.bf16.xpose.msra.mxu0 %v582
    %587 = vmatpush.bf16.xpose.msra.mxu0 %v581
    %588 = vmatpush.bf16.xpose.msra.mxu0 %v580
    %589 = vmatpush.bf16.xpose.msra.mxu0 %v579
    %590 = vmatpush.bf16.xpose.msra.mxu0 %v578
    %591 = vmatpush.bf16.xpose.msra.mxu0 %v577
    %592 = vmatpush.bf16.xpose.msra.mxu0 %v576
    %593 = vmatmul.bf16.gmra.mxu0 %v574
    %v594 = vpop.f32.mrf.mxu0
    %v595 = vadd.f32 %v584, %v594
    %v596 = vpop.f32.mrf.mxu0
    %597 = vdwg.mxu0
    %598 = vst [vmem:[#allocation6] sm:$0x1] %v595
    // Predicated region
    $region34: #{tpu_custom_call.1} parent=1 // pred_check
      _
    $region35: #{tpu_custom_call.1} parent=1 // pred_check_branch
      %600 = sbr.rel (0) target = $region37
    $region36: #{tpu_custom_call.1} parent=1 // pred_region
      %602 = vsyncadd [#allocation5], 0
      %s604 = sshll.u32 [#allocation6], 4
      %s605 = int_to_ptr.vmem [resolvable:$true] %s604
      %s606 = sshll.u32 %s7, 4
      %s607 = int_to_ptr.hbm [resolvable:$true] %s606
      %609 = dma.vmem_to_hbm [thread:$0]  %s605, 16, %s607, [#allocation5]
    $region37: #{tpu_custom_call.1} parent=1 // pred_fallthru
      _
    // Predicated region
    $region38: #{tpu_custom_call.1} parent=1 // pred_check
      _
    $region39: #{tpu_custom_call.1} parent=1 // pred_check_branch
      %611 = sbr.rel (0) target = $region41
    $region40: #{tpu_custom_call.1} parent=1 // pred_region
      %613 = dma.done [#allocation5], 16
    $region41: #{tpu_custom_call.1} parent=1 // pred_fallthru
      _
    %614 = vsyncpa [#allocation4], 1
    %615 = vsyncpa [#allocation5], 1

</llo_original>
